<compile_context>
chip_gen: v7x
topology: tpu7x:2x2x1
jax: 0.10.0
libtpu: 0.0.40
codegen_flags: <defaults>
</compile_context>

<pallas_src>
import jax
import jax.numpy as jnp
from jax import lax
from jax.experimental import pallas as pl
from jax.experimental.pallas import tpu as pltpu

EPS = 1e-5
TILE_VMEM_BUDGET = 16 * 1024 * 1024   # bytes for double-buffered in+out tiles
VMEM_LIMIT_BYTES = 40 * 1024 * 1024   # explicit scoped-VMEM limit (fits v7x 64 MiB)
MAX_BATCH_BLOCK = 8                   # cap on static in-kernel batch unroll


def conv_block1_kernel(x_ref, w1_ref, b1_ref, w2_ref, b2_ref, o_ref):
    # x_ref block: (Bblk, Cin, TILE_S); weights/biases are BN-folded, VMEM-resident.
    w1 = w1_ref[...]
    b1 = b1_ref[...]
    w2 = w2_ref[...]
    b2 = b2_ref[...]
    n_b = x_ref.shape[0]   # static Python int

    for bi in range(n_b):  # small static unroll (batch blocking)
        x = x_ref[bi]                                         # (Cin, TILE_S)
        # Layer 1: folded conv+BN -> ReLU.  Tiny-K matmul; HBM-bound kernel,
        # so the (mostly idle) MXU handles it for free.
        h = jnp.dot(w1, x, preferred_element_type=jnp.float32,
                    precision=lax.Precision.HIGHEST)
        h = jnp.maximum(h + b1, 0.0)                          # (Cout, TILE_S)
        # Layer 2: folded conv+BN -> ReLU.
        y = jnp.dot(w2, h, preferred_element_type=jnp.float32,
                    precision=lax.Precision.HIGHEST)
        y = jnp.maximum(y + b2, 0.0)                          # (Cout, TILE_S)
        o_ref[bi] = y.astype(o_ref.dtype)


def _fold_bn(w, b, gamma, beta, mean, var):
    """Fold eval-mode BatchNorm into the preceding 1x1 conv's weight/bias."""
    inv = gamma * lax.rsqrt(var + EPS)                        # (Cout,)
    w_f = w * inv[:, None]                                    # (Cout, Cin)
    b_f = ((b - mean) * inv + beta)[:, None]                  # (Cout, 1)
    return w_f, b_f


def _choose_tiling(B, Cin, Cout, HW_pad, itemsize):
    """Pick (Bblk, tile_s) under the VMEM budget, lane-dense, no partial blocks."""
    # Per-lane bytes of double-buffered input + output tiles (Bblk = 1).
    lane_bytes = 2 * (Cin + Cout) * itemsize
    max_lanes = max(128, (TILE_VMEM_BUDGET // lane_bytes) // 128 * 128)

    # tile_s = largest 128-multiple divisor of HW_pad that fits the budget,
    # so every spatial block is full (unmasked vst) and lane-dense.
    n128 = HW_pad // 128
    max_d = max(1, min(n128, max_lanes // 128))
    d = 1
    for cand in range(max_d, 0, -1):
        if n128 % cand == 0:
            d = cand
            break
    tile_s = d * 128
    n_s = HW_pad // tile_s

    # Batch blocking: amortize per-grid-step overhead when spatial tiles are few.
    per_batch_bytes = 2 * (Cin + Cout) * tile_s * itemsize
    bblk_cap = max(1, TILE_VMEM_BUDGET // per_batch_bytes)
    bblk_cap = min(bblk_cap, MAX_BATCH_BLOCK, B)
    bblk = 1
    for cand in range(int(bblk_cap), 0, -1):
        if B % cand == 0:
            bblk = cand
            break
    # Keep >= 2 grid programs when possible (v7x has 2 TensorCores per chip).
    if n_s * (B // bblk) < 2 and B >= 2:
        for cand in range(min(bblk, B // 2), 0, -1):
            if B % cand == 0:
                bblk = cand
                break
    return bblk, tile_s, n_s


def conv_block1_forward(x, params, use_bf16=False):
    """x: (B, Cin, H, W) float32 (NCHW, like PyTorch). Returns (B, Cout, H, W)."""
    B, Cin, H, W = x.shape
    Cout = params["w1"].shape[0]
    HW = H * W

    # Free, contiguous reshape: NCHW -> (B, Cin, H*W). No transpose needed.
    x3 = x.reshape(B, Cin, HW)

    # Pad the lane dim to a multiple of 128 (unmasked, lane-dense stores).
    HW_pad = pl.cdiv(HW, 128) * 128
    if HW_pad != HW:
        x3 = jnp.pad(x3, ((0, 0), (0, 0), (0, HW_pad - HW)))

    # Fold BN into conv weights/biases.
    w1f, b1f = _fold_bn(params["w1"], params["b1"],
                        params["g1"], params["be1"], params["m1"], params["v1"])
    w2f, b2f = _fold_bn(params["w2"], params["b2"],
                        params["g2"], params["be2"], params["m2"], params["v2"])

    in_dtype = jnp.bfloat16 if use_bf16 else jnp.float32
    if use_bf16:
        # ~2x HBM-traffic reduction; accumulation stays f32 on the MXU.
        x3 = x3.astype(in_dtype)
        w1f, b1f = w1f.astype(in_dtype), b1f.astype(in_dtype)
        w2f, b2f = w2f.astype(in_dtype), b2f.astype(in_dtype)

    itemsize = jnp.dtype(in_dtype).itemsize
    Bblk, tile_s, n_s = _choose_tiling(B, Cin, Cout, HW_pad, itemsize)
    grid = (B // Bblk, n_s)

    flops = 2 * B * HW_pad * (Cin * Cout + Cout * Cout)
    bytes_accessed = (itemsize * (B * Cin * HW_pad
                                  + Cin * Cout + Cout * Cout + 2 * Cout)
                      + 4 * B * Cout * HW_pad)

    out3 = pl.pallas_call(
        conv_block1_kernel,
        out_shape=jax.ShapeDtypeStruct((B, Cout, HW_pad), jnp.float32),
        grid=grid,
        in_specs=[
            pl.BlockSpec((Bblk, Cin, tile_s), lambda b, s: (b, 0, s)),
            pl.BlockSpec((Cout, Cin), lambda b, s: (0, 0)),   # VMEM-resident
            pl.BlockSpec((Cout, 1), lambda b, s: (0, 0)),
            pl.BlockSpec((Cout, Cout), lambda b, s: (0, 0)),
            pl.BlockSpec((Cout, 1), lambda b, s: (0, 0)),
        ],
        out_specs=pl.BlockSpec((Bblk, Cout, tile_s), lambda b, s: (b, 0, s)),
        compiler_params=pltpu.CompilerParams(
            dimension_semantics=("parallel", "parallel"),
            vmem_limit_bytes=VMEM_LIMIT_BYTES),
        cost_estimate=pl.CostEstimate(
            flops=flops, transcendentals=0, bytes_accessed=bytes_accessed),
    )(x3, w1f, b1f, w2f, b2f)

    if HW_pad != HW:
        out3 = out3[:, :, :HW]
    return out3.reshape(B, Cout, H, W)


def make_params(key, in_ch, out_ch):
    """Deterministic synthetic parameters matching conv_block1(in_ch, out_ch)."""
    ks = jax.random.split(key, 8)
    w1 = 0.1 * jax.random.normal(ks[0], (out_ch, in_ch), jnp.float32)
    b1 = 0.1 * jax.random.normal(ks[1], (out_ch,), jnp.float32)
    w2 = 0.1 * jax.random.normal(ks[2], (out_ch, out_ch), jnp.float32)
    b2 = 0.1 * jax.random.normal(ks[3], (out_ch,), jnp.float32)
    g1 = 1.0 + 0.05 * jax.random.normal(ks[4], (out_ch,), jnp.float32)
    be1 = 0.05 * jax.random.normal(ks[5], (out_ch,), jnp.float32)
    m1 = jnp.zeros((out_ch,), jnp.float32)
    v1 = jnp.ones((out_ch,), jnp.float32)
    g2 = 1.0 + 0.05 * jax.random.normal(ks[6], (out_ch,), jnp.float32)
    be2 = 0.05 * jax.random.normal(ks[7], (out_ch,), jnp.float32)
    m2 = jnp.zeros((out_ch,), jnp.float32)
    v2 = jnp.ones((out_ch,), jnp.float32)
    return dict(w1=w1, b1=b1, g1=g1, be1=be1, m1=m1, v1=v1,
                w2=w2, b2=b2, g2=g2, be2=be2, m2=m2, v2=v2)


def reference_forward(x, p):
    """Pure-JAX reference (unfused conv -> BN -> ReLU, twice) in NCHW."""
    def bn(h, g, be, m, v):
        return ((h - m[None, :, None, None])
                * lax.rsqrt(v + EPS)[None, :, None, None]
                * g[None, :, None, None] + be[None, :, None, None])

    hp = lax.Precision.HIGHEST
    h = jnp.einsum("oc,bchw->bohw", p["w1"], x, precision=hp)
    h = h + p["b1"][None, :, None, None]
    h = jnp.maximum(bn(h, p["g1"], p["be1"], p["m1"], p["v1"]), 0.0)
    y = jnp.einsum("oc,bchw->bohw", p["w2"], h, precision=hp)
    y = y + p["b2"][None, :, None, None]
    y = jnp.maximum(bn(y, p["g2"], p["be2"], p["m2"], p["v2"]), 0.0)
    return y


if __name__ == "__main__":
    key = jax.random.PRNGKey(0)
    kx, kp = jax.random.split(key)

    B, Cin, Cout, H, W = 2, 4, 8, 16, 16
    x = jax.random.normal(kx, (B, Cin, H, W), jnp.float32)
    params = make_params(kp, Cin, Cout)

    y = conv_block1_forward(x, params)
    y = jax.block_until_ready(y)

    y_ref = reference_forward(x, params)
    assert y.shape == (B, Cout, H, W)
    assert jnp.allclose(y, y_ref, atol=1e-5, rtol=1e-5)

    print("KERNEL_OK")
</pallas_src>

<mosaic_0001>
module attributes {stable_mosaic.version = 11 : i64} {
  func.func @conv_block1_kernel(%arg0: i32, %arg1: i32, %arg2: memref<1x4x256xf32, #tpu.memory_space<vmem>>, %arg3: memref<8x4xf32, #tpu.memory_space<vmem>>, %arg4: memref<8x1xf32, #tpu.memory_space<vmem>>, %arg5: memref<8x8xf32, #tpu.memory_space<vmem>>, %arg6: memref<8x1xf32, #tpu.memory_space<vmem>>, %arg7: memref<1x8x256xf32, #tpu.memory_space<vmem>>) attributes {dimension_semantics = [#tpu.dimension_semantics<parallel>, #tpu.dimension_semantics<parallel>], iteration_bounds = array<i64: 2, 1>, scalar_prefetch = 0 : i64, scratch_operands = 0 : i64, tpu.core_type = #tpu.core_type<tc>, window_params = [{transform_indices = @transform_0, window_bounds = array<i64: 1, 4, 256>}, {pipeline_mode = #tpu.pipeline_mode<synchronous>, transform_indices = @transform_1, window_bounds = array<i64: 8, 4>}, {pipeline_mode = #tpu.pipeline_mode<synchronous>, transform_indices = @transform_2, window_bounds = array<i64: 8, 1>}, {pipeline_mode = #tpu.pipeline_mode<synchronous>, transform_indices = @transform_3, window_bounds = array<i64: 8, 8>}, {pipeline_mode = #tpu.pipeline_mode<synchronous>, transform_indices = @transform_4, window_bounds = array<i64: 8, 1>}, {transform_indices = @transform_5, window_bounds = array<i64: 1, 8, 256>}]} {
    %c0 = arith.constant 0 : index
    %c0_0 = arith.constant 0 : index
    %0 = vector.load %arg3[%c0, %c0_0] : memref<8x4xf32, #tpu.memory_space<vmem>>, vector<8x4xf32>
    %c0_1 = arith.constant 0 : index
    %c0_2 = arith.constant 0 : index
    %1 = vector.load %arg4[%c0_1, %c0_2] : memref<8x1xf32, #tpu.memory_space<vmem>>, vector<8x1xf32>
    %c0_3 = arith.constant 0 : index
    %c0_4 = arith.constant 0 : index
    %2 = vector.load %arg5[%c0_3, %c0_4] : memref<8x8xf32, #tpu.memory_space<vmem>>, vector<8x8xf32>
    %c0_5 = arith.constant 0 : index
    %c0_6 = arith.constant 0 : index
    %3 = vector.load %arg6[%c0_5, %c0_6] : memref<8x1xf32, #tpu.memory_space<vmem>>, vector<8x1xf32>
    %c0_7 = arith.constant 0 : index
    %c0_8 = arith.constant 0 : index
    %c0_9 = arith.constant 0 : index
    %4 = vector.load %arg2[%c0_7, %c0_8, %c0_9] : memref<1x4x256xf32, #tpu.memory_space<vmem>>, vector<1x4x256xf32>
    %5 = vector.shape_cast %4 : vector<1x4x256xf32> to vector<4x256xf32>
    %cst = arith.constant dense<0.000000e+00> : vector<8x256xf32>
    %6 = tpu.matmul %0, %5, %cst {dimension_numbers = #tpu.dot_dimension_numbers<[1], [0], [0], [1], [0, 0, 1, 1], [], []>, precision = #tpu.contract_precision<fp32>} : vector<8x4xf32>, vector<4x256xf32>, vector<8x256xf32> -> vector<8x256xf32>
    %7 = vector.broadcast %1 : vector<8x1xf32> to vector<8x256xf32>
    %8 = arith.addf %6, %7 : vector<8x256xf32>
    %cst_10 = arith.constant 0.000000e+00 : f32
    %9 = vector.broadcast %cst_10 : f32 to vector<8x256xf32>
    %10 = arith.maximumf %8, %9 : vector<8x256xf32>
    %cst_11 = arith.constant dense<0.000000e+00> : vector<8x256xf32>
    %11 = tpu.matmul %2, %10, %cst_11 {dimension_numbers = #tpu.dot_dimension_numbers<[1], [0], [0], [1], [0, 0, 1, 1], [], []>, precision = #tpu.contract_precision<fp32>} : vector<8x8xf32>, vector<8x256xf32>, vector<8x256xf32> -> vector<8x256xf32>
    %12 = vector.broadcast %3 : vector<8x1xf32> to vector<8x256xf32>
    %13 = arith.addf %11, %12 : vector<8x256xf32>
    %cst_12 = arith.constant 0.000000e+00 : f32
    %14 = vector.broadcast %cst_12 : f32 to vector<8x256xf32>
    %15 = arith.maximumf %13, %14 : vector<8x256xf32>
    %c0_13 = arith.constant 0 : index
    %c0_14 = arith.constant 0 : index
    %c0_15 = arith.constant 0 : index
    %16 = vector.load %arg7[%c0_13, %c0_14, %c0_15] : memref<1x8x256xf32, #tpu.memory_space<vmem>>, vector<1x8x256xf32>
    %17 = vector.shape_cast %16 : vector<1x8x256xf32> to vector<8x256xf32>
    %18 = vector.shape_cast %15 : vector<8x256xf32> to vector<1x8x256xf32>
    tpu.vector_store %arg7[%c0_13, %c0_14, %c0_15], %18 {strides = array<i32>} : memref<1x8x256xf32, #tpu.memory_space<vmem>>, vector<1x8x256xf32>,
    return
  }
  func.func @transform_0(%arg0: i32, %arg1: i32) -> (i32, i32, i32) {
    %c0_i32 = arith.constant 0 : i32
    %c0_i32_0 = arith.constant 0 : i32
    return %arg0, %c0_i32, %arg1 : i32, i32, i32
  }
  func.func @transform_1(%arg0: i32, %arg1: i32) -> (i32, i32) {
    %c0_i32 = arith.constant 0 : i32
    %c0_i32_0 = arith.constant 0 : i32
    %c0_i32_1 = arith.constant 0 : i32
    return %c0_i32, %c0_i32_0 : i32, i32
  }
  func.func @transform_2(%arg0: i32, %arg1: i32) -> (i32, i32) {
    %c0_i32 = arith.constant 0 : i32
    %c0_i32_0 = arith.constant 0 : i32
    %c0_i32_1 = arith.constant 0 : i32
    return %c0_i32, %c0_i32_0 : i32, i32
  }
  func.func @transform_3(%arg0: i32, %arg1: i32) -> (i32, i32) {
    %c0_i32 = arith.constant 0 : i32
    %c0_i32_0 = arith.constant 0 : i32
    %c0_i32_1 = arith.constant 0 : i32
    return %c0_i32, %c0_i32_0 : i32, i32
  }
  func.func @transform_4(%arg0: i32, %arg1: i32) -> (i32, i32) {
    %c0_i32 = arith.constant 0 : i32
    %c0_i32_0 = arith.constant 0 : i32
    %c0_i32_1 = arith.constant 0 : i32
    return %c0_i32, %c0_i32_0 : i32, i32
  }
  func.func @transform_5(%arg0: i32, %arg1: i32) -> (i32, i32, i32) {
    %c0_i32 = arith.constant 0 : i32
    %c0_i32_0 = arith.constant 0 : i32
    return %arg0, %c0_i32, %arg1 : i32, i32, i32
  }
}

</mosaic_0001>

<llo_original>
// kernel: tpu_custom_call.1
$region0: #{tpu_custom_call.1}
  #allocation0 [shape = 'u32[]', space=smem, size = 0x4, offset = 0x4, fixed_abs, tag = 'smem constant byte address 0x4 - core index']
  #allocation1 [shape = 'u32[144,128]{1,0:T(1,128)}', space=vmem, size = 0x12000, scoped, tag = 'internal scratch']
  %s0 = inlined_call_operand.vmem [shape: f32[2,4,256], index: 0, kind: input, shape index: {}]
  %s1 = inlined_call_operand.vmem [shape: f32[8,4], index: 1, kind: input, shape index: {}]
  %s2 = inlined_call_operand.vmem [shape: f32[8,1], index: 2, kind: input, shape index: {}]
  %s3 = inlined_call_operand.vmem [shape: f32[8,8], index: 3, kind: input, shape index: {}]
  %s4 = inlined_call_operand.vmem [shape: f32[8,1], index: 4, kind: input, shape index: {}]
  %s5 = inlined_call_operand.hbm [shape: f32[2,8,256], index: 5, kind: output, shape index: {}]
  %s6 = sld [smem:[#allocation0]]
  $region53: #{tpu_custom_call.1} parent=0
    _
  %s8 = ssub.s32 1, %s6
  %s9 = scalar_select 0, %s8, %s6
  $region1: #{tpu_custom_call.1} parent=0
    #allocation2 [shape = 'u8[16384]{0}', space=vmem, size = 0x4000, scoped, tag = 'output window, operand 0']
    #allocation3 [shape = 's32[2]{0}', space=sflag, size = 0x8, scoped, tag = 'scoped memory for tpu_custom_call.1']
    %10 = vsyncpa [#allocation3], 0
    %s11 = scalar_lea.sflag [#allocation3], 1
    %12 = vsyncpa %s11, 0
    loop: start=0, step=1, limit=4
    $region2: #{tpu_custom_call.1} parent=1 // loop_pre_header
      _
    $region3: #{tpu_custom_call.1} parent=1 // loop_header
      %s14 = sphi 0, %s18
      %p15 = scmp.ge.s32.totalorder %s14, 4
      %s21 = sphi 0, %s33
      %s22 = sphi 0, %s29
      %s23 = sphi 0, %s21
      %s24 = sphi 0, %s22
      %s25 = sphi 0, %s23
      %s26 = sphi 0, %s24
      %s38 = sphi 0, %s40
      %s41 = sphi 0, %s38
      %s42 = sphi 0, %s41
      %s58 = sphi 0, %s42
      %s62 = sphi 0, %s62
      %s64 = sphi 0, %s62
      %s65 = sphi 0, %s64
      %s79 = sphi 0, %s65
      %s83 = sphi 0, %s83
      %s85 = sphi 0, %s83
      %s86 = sphi 0, %s85
      %s100 = sphi 0, %s86
      %s104 = sphi 0, %s104
      %s106 = sphi 0, %s104
      %s107 = sphi 0, %s106
      %s121 = sphi 0, %s107
      %s125 = sphi 0, %s125
      %s127 = sphi 0, %s125
      %s128 = sphi 0, %s127
      %s142 = sphi 0, %s128
      %s150 = sphi 0, %s152
      %s153 = sphi 0, %s150
      %s154 = sphi 0, %s153
      %s170 = sphi 0, %s154
    $region4: #{tpu_custom_call.1} parent=1 // loop_header_branch
      %17 = sbr.rel (%p15) target = $region8
    $region5: #{tpu_custom_call.1} parent=1 // loop_body
      %s19 = ssub.s32 %s14, 1
      %s20 = ssub.s32 %s14, 2
      %s27 = sadd.s32 1, %s22
      %p28 = scmp.ge.s32.totalorder %s27, 1
      %s29 = scalar_select %p28, 0, %s27
      %s30 = sadd.s32 1, %s21
      %s31 = scalar_select %p28, %s30, %s21
      %p32 = scmp.ge.s32.totalorder %s31, 2
      %s33 = scalar_select %p32, 0, %s31
      %s34 = ssub.s32 %s21, %s33
      %s35 = ssub.s32 %s22, %s29
      %s36 = sor.u32 %s34, %s35
      %p37 = scmp.eq.s32.totalorder %s36, 0
      %s39 = sadd.s32 %s38, 1
      %s40 = scalar_select %p37, %s38, %s39
      %p43 = pneg %p37
      %p44 = scmp.eq.s32.totalorder %s14, 1
      %p45 = por %p43, %p44
      %p46 = scmp.ne.s32.totalorder %s38, %s41
      %p47 = scmp.eq.s32.totalorder %s14, 0
      %p48 = por %p46, %p47
      %p49 = scmp.ne.s32.totalorder %s38, %s41
      %p50 = scmp.eq.s32.totalorder %s19, 1
      %p51 = por %p49, %p50
      %p52 = scmp.ne.s32.totalorder %s41, %s42
      %p53 = scmp.eq.s32.totalorder %s19, 0
      %p54 = por %p52, %p53
      %p55 = scmp.ne.s32.totalorder %s41, %s42
      %p56 = scmp.eq.s32.totalorder %s20, 1
      %p57 = por %p55, %p56
      %p59 = scmp.ne.s32.totalorder %s42, %s58
      %p60 = scmp.eq.s32.totalorder %s20, 0
      %p61 = por %p59, %p60
      %s63 = sadd.s32 %s62, 1
      %p66 = scmp.eq.s32.totalorder %s14, 1
      %p67 = scmp.ne.s32.totalorder %s62, %s64
      %p68 = scmp.eq.s32.totalorder %s14, 0
      %p69 = por %p67, %p68
      %p70 = scmp.ne.s32.totalorder %s62, %s64
      %p71 = scmp.eq.s32.totalorder %s19, 1
      %p72 = por %p70, %p71
      %p73 = scmp.ne.s32.totalorder %s64, %s65
      %p74 = scmp.eq.s32.totalorder %s19, 0
      %p75 = por %p73, %p74
      %p76 = scmp.ne.s32.totalorder %s64, %s65
      %p77 = scmp.eq.s32.totalorder %s20, 1
      %p78 = por %p76, %p77
      %p80 = scmp.ne.s32.totalorder %s65, %s79
      %p81 = scmp.eq.s32.totalorder %s20, 0
      %p82 = por %p80, %p81
      %s84 = sadd.s32 %s83, 1
      %p87 = scmp.eq.s32.totalorder %s14, 1
      %p88 = scmp.ne.s32.totalorder %s83, %s85
      %p89 = scmp.eq.s32.totalorder %s14, 0
      %p90 = por %p88, %p89
      %p91 = scmp.ne.s32.totalorder %s83, %s85
      %p92 = scmp.eq.s32.totalorder %s19, 1
      %p93 = por %p91, %p92
      %p94 = scmp.ne.s32.totalorder %s85, %s86
      %p95 = scmp.eq.s32.totalorder %s19, 0
      %p96 = por %p94, %p95
      %p97 = scmp.ne.s32.totalorder %s85, %s86
      %p98 = scmp.eq.s32.totalorder %s20, 1
      %p99 = por %p97, %p98
      %p101 = scmp.ne.s32.totalorder %s86, %s100
      %p102 = scmp.eq.s32.totalorder %s20, 0
      %p103 = por %p101, %p102
      %s105 = sadd.s32 %s104, 1
      %p108 = scmp.eq.s32.totalorder %s14, 1
      %p109 = scmp.ne.s32.totalorder %s104, %s106
      %p110 = scmp.eq.s32.totalorder %s14, 0
      %p111 = por %p109, %p110
      %p112 = scmp.ne.s32.totalorder %s104, %s106
      %p113 = scmp.eq.s32.totalorder %s19, 1
      %p114 = por %p112, %p113
      %p115 = scmp.ne.s32.totalorder %s106, %s107
      %p116 = scmp.eq.s32.totalorder %s19, 0
      %p117 = por %p115, %p116
      %p118 = scmp.ne.s32.totalorder %s106, %s107
      %p119 = scmp.eq.s32.totalorder %s20, 1
      %p120 = por %p118, %p119
      %p122 = scmp.ne.s32.totalorder %s107, %s121
      %p123 = scmp.eq.s32.totalorder %s20, 0
      %p124 = por %p122, %p123
      %s126 = sadd.s32 %s125, 1
      %p129 = scmp.eq.s32.totalorder %s14, 1
      %p130 = scmp.ne.s32.totalorder %s125, %s127
      %p131 = scmp.eq.s32.totalorder %s14, 0
      %p132 = por %p130, %p131
      %p133 = scmp.ne.s32.totalorder %s125, %s127
      %p134 = scmp.eq.s32.totalorder %s19, 1
      %p135 = por %p133, %p134
      %p136 = scmp.ne.s32.totalorder %s127, %s128
      %p137 = scmp.eq.s32.totalorder %s19, 0
      %p138 = por %p136, %p137
      %p139 = scmp.ne.s32.totalorder %s127, %s128
      %p140 = scmp.eq.s32.totalorder %s20, 1
      %p141 = por %p139, %p140
      %p143 = scmp.ne.s32.totalorder %s128, %s142
      %p144 = scmp.eq.s32.totalorder %s20, 0
      %p145 = por %p143, %p144
      %s146 = ssub.s32 %s21, %s33
      %s147 = ssub.s32 %s22, %s29
      %s148 = sor.u32 %s146, %s147
      %p149 = scmp.eq.s32.totalorder %s148, 0
      %s151 = sadd.s32 %s150, 1
      %s152 = scalar_select %p149, %s150, %s151
      %p155 = pneg %p149
      %p156 = scmp.eq.s32.totalorder %s14, 1
      %p157 = por %p155, %p156
      %p158 = scmp.ne.s32.totalorder %s150, %s153
      %p159 = scmp.eq.s32.totalorder %s14, 0
      %p160 = por %p158, %p159
      %p161 = scmp.ne.s32.totalorder %s150, %s153
      %p162 = scmp.eq.s32.totalorder %s19, 1
      %p163 = por %p161, %p162
      %p164 = scmp.ne.s32.totalorder %s153, %s154
      %p165 = scmp.eq.s32.totalorder %s19, 0
      %p166 = por %p164, %p165
      %p167 = scmp.ne.s32.totalorder %s153, %s154
      %p168 = scmp.eq.s32.totalorder %s20, 1
      %p169 = por %p167, %p168
      %p171 = scmp.ne.s32.totalorder %s154, %s170
      %p172 = scmp.eq.s32.totalorder %s20, 0
      %p173 = por %p171, %p172
      %p174 = scmp.le.s32.totalorder 1, %s14
      %p175 = scmp.lt.s32.totalorder %s14, 3
      %p176 = pnand %p174, %p175
      %p177 = pneg %p176
      // Predicated region
      $region9: #{tpu_custom_call.1} parent=5 // pred_check
        _
      $region10: #{tpu_custom_call.1} parent=5 // pred_check_branch
        %179 = sbr.rel (%p176) target = $region12
      $region11: #{tpu_custom_call.1} parent=5 // pred_region
        %s180 = ssub.s32 %s14, 1
        // Predicated region
        $region13: #{tpu_custom_call.1} parent=11 // pred_check
          %p181 = pneg %p75
        $region14: #{tpu_custom_call.1} parent=11 // pred_check_branch
          %183 = sbr.rel (%p181) target = $region16
        $region15: #{tpu_custom_call.1} parent=11 // pred_region
          _
        $region16: #{tpu_custom_call.1} parent=11 // pred_fallthru
          _
        // Predicated region
        $region17: #{tpu_custom_call.1} parent=11 // pred_check
          %p184 = pneg %p96
        $region18: #{tpu_custom_call.1} parent=11 // pred_check_branch
          %186 = sbr.rel (%p184) target = $region20
        $region19: #{tpu_custom_call.1} parent=11 // pred_region
          _
        $region20: #{tpu_custom_call.1} parent=11 // pred_fallthru
          _
        // Predicated region
        $region21: #{tpu_custom_call.1} parent=11 // pred_check
          %p187 = pneg %p117
        $region22: #{tpu_custom_call.1} parent=11 // pred_check_branch
          %189 = sbr.rel (%p187) target = $region24
        $region23: #{tpu_custom_call.1} parent=11 // pred_region
          _
        $region24: #{tpu_custom_call.1} parent=11 // pred_fallthru
          _
        // Predicated region
        $region25: #{tpu_custom_call.1} parent=11 // pred_check
          %p190 = pneg %p138
        $region26: #{tpu_custom_call.1} parent=11 // pred_check_branch
          %192 = sbr.rel (%p190) target = $region28
        $region27: #{tpu_custom_call.1} parent=11 // pred_region
          _
        $region28: #{tpu_custom_call.1} parent=11 // pred_fallthru
          _
      $region12: #{tpu_custom_call.1} parent=5 // pred_fallthru
        _
      %p193 = scmp.lt.s32.totalorder %s14, 2
      // Predicated region
      $region29: #{tpu_custom_call.1} parent=5 // pred_check
        %p194 = pneg %p193
      $region30: #{tpu_custom_call.1} parent=5 // pred_check_branch
        %196 = sbr.rel (%p194) target = $region32
      $region31: #{tpu_custom_call.1} parent=5 // pred_region
        // Predicated region
        $region33: #{tpu_custom_call.1} parent=31 // pred_check
          %p197 = pneg %p48
        $region34: #{tpu_custom_call.1} parent=31 // pred_check_branch
          %199 = sbr.rel (%p197) target = $region36
        $region35: #{tpu_custom_call.1} parent=31 // pred_region
          %s200 = smul.u32 2, %s22
          %p201 = scmp.lt.s32.totalorder %s21, 1
          %s202 = scalar_select %p201, %s21, 1
          %p203 = scmp.lt.s32.totalorder %s200, 1
          %s204 = scalar_select %p203, %s200, 1
          %s205 = smul.addr %s202, 2
          %s206 = sadd.s32 %s204, %s205
          %s207 = smul.addr %s206, 4
          %s208 = scalar_lea.vmem %s0, %s207
          %s209 = smul.u32 2, %s22
        $region36: #{tpu_custom_call.1} parent=31 // pred_fallthru
          _
      $region32: #{tpu_custom_call.1} parent=5 // pred_fallthru
        _
      %p210 = scmp.le.s32.totalorder 1, %s14
      %p211 = scmp.lt.s32.totalorder %s14, 3
      %p212 = pnand %p210, %p211
      %p213 = pneg %p212
      // Predicated region
      $region37: #{tpu_custom_call.1} parent=5 // pred_check
        _
      $region38: #{tpu_custom_call.1} parent=5 // pred_check_branch
        %215 = sbr.rel (%p212) target = $region40
      $region39: #{tpu_custom_call.1} parent=5 // pred_region
        %s216 = ssub.s32 %s14, 1
        %s217 = smul.u32 2, %s24
        %p218 = scmp.lt.s32.totalorder %s23, 1
        %s219 = scalar_select %p218, %s23, 1
        %p220 = scmp.lt.s32.totalorder %s217, 1
        %s221 = scalar_select %p220, %s217, 1
        %s222 = smul.addr %s219, 2
        %s223 = sadd.s32 %s221, %s222
        %s224 = smul.addr %s223, 4
        %s225 = scalar_lea.vmem %s0, %s224
        %p226 = pneg %p54
        %p227 = pneg %p51
        %p228 = pneg %p75
        %p229 = pneg %p72
        %p230 = pneg %p96
        %p231 = pneg %p93
        %p232 = pneg %p117
        %p233 = pneg %p114
        %p234 = pneg %p138
        %p235 = pneg %p135
        %p236 = pneg %p166
        %p237 = pneg %p163
        %s238 = sand.u32 %s153, 1
        %s239 = scalar_lea.sflag [#allocation3], %s238
        %s240 = sand.u32 %s153, 1
        %s241 = smul.addr %s240, 16
        %s242 = scalar_lea.vmem [#allocation2], %s241
        %s243 = smul.u32 2, %s24
        %p244 = scmp.lt.s32.totalorder %s23, 1
        %s245 = scalar_select %p244, %s23, 1
        %p246 = scmp.lt.s32.totalorder %s243, 1
        %s247 = scalar_select %p246, %s243, 1
        %s248 = smul.addr %s245, 2
        %s249 = sadd.s32 %s247, %s248
        %s250 = smul.addr %s249, 4
        %s251 = scalar_lea.vmem %s0, %s250
        %s252 = smul.u32 2, %s24
        %s253 = smul.u32 2, %s24
        %v254 = vld [vmem:[%s1] sm:$0xff]
        %v255 = vld [vmem:[%s2] sm:$0xff]
        %v256 = vld [vmem:[%s3] sm:$0xff]
        %v257 = vld [vmem:[%s4] sm:$0xff]
        %v258 = vld [vmem:[%s251] sm:$0xff]
        %260 = vset.pattern.permute.xlu0 0
        %261 = vperm.xlu0 %260, %v255
        %v262 = vpop.permute.xlu0 %261
        %v265 = vcombine.high %v258, %v258
        %vm266 = vcmask 31744
        %v268 = vsel %vm266, %v254, 0
        %vm270 = vcmask 1043456
        %v271 = vsel %vm270, %v258, 0
        %v273 = vsel %vm270, %v265, 0
        %v275 = vand.u32 %v273, 4294901760
        %276 = vmatprep.subr.mxu0 %v275
        %v277 = vand.u32 %v271, 4294901760
        %278 = vmatpush1.msra.mxu0 %v277
        %279 = vmatprep.subr.mxu0 0.0
        %280 = vmatpush1.msra.mxu0 0.0
        %281 = vmatprep.subr.mxu0 0.0
        %282 = vmatpush1.msra.mxu0 0.0
        %283 = vmatprep.subr.mxu0 0.0
        %284 = vmatpush1.msra.mxu0 0.0
        %285 = vmatprep.subr.mxu0 0.0
        %286 = vmatpush1.msra.mxu0 0.0
        %287 = vmatprep.subr.mxu0 0.0
        %288 = vmatpush1.msra.mxu0 0.0
        %289 = vmatprep.subr.mxu0 0.0
        %290 = vmatpush1.msra.mxu0 0.0
        %291 = vmatprep.subr.mxu0 0.0
        %292 = vmatpush1.msra.mxu0 0.0
        %293 = vmatprep.subr.mxu0 0.0
        %294 = vmatpush1.msra.mxu0 0.0
        %295 = vmatprep.subr.mxu0 0.0
        %296 = vmatpush1.msra.mxu0 0.0
        %297 = vmatprep.subr.mxu0 0.0
        %298 = vmatpush1.msra.mxu0 0.0
        %299 = vmatprep.subr.mxu0 0.0
        %300 = vmatpush1.msra.mxu0 0.0
        %301 = vmatprep.subr.mxu0 0.0
        %302 = vmatpush1.msra.mxu0 0.0
        %303 = vmatprep.subr.mxu0 0.0
        %304 = vmatpush1.msra.mxu0 0.0
        %305 = vmatprep.subr.mxu0 0.0
        %306 = vmatpush1.msra.mxu0 0.0
        %307 = vmatprep.subr.mxu0 0.0
        %308 = vmatpush1.msra.mxu0 0.0
        %309 = vmatprep.subr.mxu0 0.0
        %310 = vmatpush1.msra.mxu0 0.0
        %311 = vmatprep.subr.mxu0 0.0
        %312 = vmatpush1.msra.mxu0 0.0
        %313 = vmatprep.subr.mxu0 0.0
        %314 = vmatpush1.msra.mxu0 0.0
        %315 = vmatprep.subr.mxu0 0.0
        %316 = vmatpush1.msra.mxu0 0.0
        %317 = vmatprep.subr.mxu0 0.0
        %318 = vmatpush1.msra.mxu0 0.0
        %319 = vmatprep.subr.mxu0 0.0
        %320 = vmatpush1.msra.mxu0 0.0
        %321 = vmatprep.subr.mxu0 0.0
        %322 = vmatpush1.msra.mxu0 0.0
        %323 = vmatprep.subr.mxu0 0.0
        %324 = vmatpush1.msra.mxu0 0.0
        %325 = vmatprep.subr.mxu0 0.0
        %326 = vmatpush1.msra.mxu0 0.0
        %327 = vmatprep.subr.mxu0 0.0
        %328 = vmatpush1.msra.mxu0 0.0
        %329 = vmatprep.subr.mxu0 0.0
        %330 = vmatpush1.msra.mxu0 0.0
        %331 = vmatprep.subr.mxu0 0.0
        %332 = vmatpush1.msra.mxu0 0.0
        %333 = vmatprep.subr.mxu0 0.0
        %334 = vmatpush1.msra.mxu0 0.0
        %335 = vmatprep.subr.mxu0 0.0
        %336 = vmatpush1.msra.mxu0 0.0
        %337 = vmatprep.subr.mxu0 0.0
        %338 = vmatpush1.msra.mxu0 0.0
        %339 = vmatprep.subr.mxu0 0.0
        %340 = vmatpush1.msra.mxu0 0.0
        %341 = vmatprep.mubr.f32.mxu0 0.0
        %v342 = vand.u32 %v268, 4294901760
        %v343 = vsub.f32 %v268, %v342
        %v344 = vand.u32 %v343, 4294901760
        %v345 = vsub.f32 %v343, %v344
        %v346 = vand.u32 %v345, 4294901760
        %347 = vmatmul.mubr.f32.gmra.mrb[0].mxu0 %v346
        %v348 = vpop.f32.mrb[0].mxu0
        %v349 = vadd.f32 %v262, %v348
        %v350 = vpop.f32.mrb[0].mxu0
        %v351 = vadd.f32 %v262, %v350
        %352 = vdwg.mxu0
        %v353 = vand.u32 %v273, 4294901760
        %v354 = vsub.f32 %v273, %v353
        %v355 = vand.u32 %v354, 4294901760
        %v356 = vsub.f32 %v354, %v355
        %v357 = vand.u32 %v356, 4294901760
        %358 = vmatprep.subr.mxu0 %v357
        %v359 = vand.u32 %v271, 4294901760
        %v360 = vsub.f32 %v271, %v359
        %v361 = vand.u32 %v360, 4294901760
        %v362 = vsub.f32 %v360, %v361
        %v363 = vand.u32 %v362, 4294901760
        %364 = vmatpush1.msra.mxu0 %v363
        %365 = vmatprep.subr.mxu0 0.0
        %366 = vmatpush1.msra.mxu0 0.0
        %367 = vmatprep.subr.mxu0 0.0
        %368 = vmatpush1.msra.mxu0 0.0
        %369 = vmatprep.subr.mxu0 0.0
        %370 = vmatpush1.msra.mxu0 0.0
        %371 = vmatprep.subr.mxu0 0.0
        %372 = vmatpush1.msra.mxu0 0.0
        %373 = vmatprep.subr.mxu0 0.0
        %374 = vmatpush1.msra.mxu0 0.0
        %375 = vmatprep.subr.mxu0 0.0
        %376 = vmatpush1.msra.mxu0 0.0
        %377 = vmatprep.subr.mxu0 0.0
        %378 = vmatpush1.msra.mxu0 0.0
        %379 = vmatprep.subr.mxu0 0.0
        %380 = vmatpush1.msra.mxu0 0.0
        %381 = vmatprep.subr.mxu0 0.0
        %382 = vmatpush1.msra.mxu0 0.0
        %383 = vmatprep.subr.mxu0 0.0
        %384 = vmatpush1.msra.mxu0 0.0
        %385 = vmatprep.subr.mxu0 0.0
        %386 = vmatpush1.msra.mxu0 0.0
        %387 = vmatprep.subr.mxu0 0.0
        %388 = vmatpush1.msra.mxu0 0.0
        %389 = vmatprep.subr.mxu0 0.0
        %390 = vmatpush1.msra.mxu0 0.0
        %391 = vmatprep.subr.mxu0 0.0
        %392 = vmatpush1.msra.mxu0 0.0
        %393 = vmatprep.subr.mxu0 0.0
        %394 = vmatpush1.msra.mxu0 0.0
        %395 = vmatprep.subr.mxu0 0.0
        %396 = vmatpush1.msra.mxu0 0.0
        %397 = vmatprep.subr.mxu0 0.0
        %398 = vmatpush1.msra.mxu0 0.0
        %399 = vmatprep.subr.mxu0 0.0
        %400 = vmatpush1.msra.mxu0 0.0
        %401 = vmatprep.subr.mxu0 0.0
        %402 = vmatpush1.msra.mxu0 0.0
        %403 = vmatprep.subr.mxu0 0.0
        %404 = vmatpush1.msra.mxu0 0.0
        %405 = vmatprep.subr.mxu0 0.0
        %406 = vmatpush1.msra.mxu0 0.0
        %407 = vmatprep.subr.mxu0 0.0
        %408 = vmatpush1.msra.mxu0 0.0
        %409 = vmatprep.subr.mxu0 0.0
        %410 = vmatpush1.msra.mxu0 0.0
        %411 = vmatprep.subr.mxu0 0.0
        %412 = vmatpush1.msra.mxu0 0.0
        %413 = vmatprep.subr.mxu0 0.0
        %414 = vmatpush1.msra.mxu0 0.0
        %415 = vmatprep.subr.mxu0 0.0
        %416 = vmatpush1.msra.mxu0 0.0
        %417 = vmatprep.subr.mxu0 0.0
        %418 = vmatpush1.msra.mxu0 0.0
        %419 = vmatprep.subr.mxu0 0.0
        %420 = vmatpush1.msra.mxu0 0.0
        %421 = vmatprep.subr.mxu0 0.0
        %422 = vmatpush1.msra.mxu0 0.0
        %423 = vmatprep.subr.mxu0 0.0
        %424 = vmatpush1.msra.mxu0 0.0
        %425 = vmatprep.subr.mxu0 0.0
        %426 = vmatpush1.msra.mxu0 0.0
        %427 = vmatprep.mubr.f32.mxu0 0.0
        %v428 = vand.u32 %v268, 4294901760
        %429 = vmatmul.mubr.f32.gmra.mrb[0].mxu0 %v428
        %v430 = vpop.f32.mrb[0].mxu0
        %v431 = vadd.f32 %v349, %v430
        %v432 = vpop.f32.mrb[0].mxu0
        %v433 = vadd.f32 %v351, %v432
        %434 = vdwg.mxu0
        %v435 = vand.u32 %v273, 4294901760
        %v436 = vsub.f32 %v273, %v435
        %437 = vmatprep.subr.mxu0 %v436
        %v438 = vand.u32 %v271, 4294901760
        %v439 = vsub.f32 %v271, %v438
        %440 = vmatpush1.msra.mxu0 %v439
        %441 = vmatprep.subr.mxu0 0.0
        %442 = vmatpush1.msra.mxu0 0.0
        %443 = vmatprep.subr.mxu0 0.0
        %444 = vmatpush1.msra.mxu0 0.0
        %445 = vmatprep.subr.mxu0 0.0
        %446 = vmatpush1.msra.mxu0 0.0
        %447 = vmatprep.subr.mxu0 0.0
        %448 = vmatpush1.msra.mxu0 0.0
        %449 = vmatprep.subr.mxu0 0.0
        %450 = vmatpush1.msra.mxu0 0.0
        %451 = vmatprep.subr.mxu0 0.0
        %452 = vmatpush1.msra.mxu0 0.0
        %453 = vmatprep.subr.mxu0 0.0
        %454 = vmatpush1.msra.mxu0 0.0
        %455 = vmatprep.subr.mxu0 0.0
        %456 = vmatpush1.msra.mxu0 0.0
        %457 = vmatprep.subr.mxu0 0.0
        %458 = vmatpush1.msra.mxu0 0.0
        %459 = vmatprep.subr.mxu0 0.0
        %460 = vmatpush1.msra.mxu0 0.0
        %461 = vmatprep.subr.mxu0 0.0
        %462 = vmatpush1.msra.mxu0 0.0
        %463 = vmatprep.subr.mxu0 0.0
        %464 = vmatpush1.msra.mxu0 0.0
        %465 = vmatprep.subr.mxu0 0.0
        %466 = vmatpush1.msra.mxu0 0.0
        %467 = vmatprep.subr.mxu0 0.0
        %468 = vmatpush1.msra.mxu0 0.0
        %469 = vmatprep.subr.mxu0 0.0
        %470 = vmatpush1.msra.mxu0 0.0
        %471 = vmatprep.subr.mxu0 0.0
        %472 = vmatpush1.msra.mxu0 0.0
        %473 = vmatprep.subr.mxu0 0.0
        %474 = vmatpush1.msra.mxu0 0.0
        %475 = vmatprep.subr.mxu0 0.0
        %476 = vmatpush1.msra.mxu0 0.0
        %477 = vmatprep.subr.mxu0 0.0
        %478 = vmatpush1.msra.mxu0 0.0
        %479 = vmatprep.subr.mxu0 0.0
        %480 = vmatpush1.msra.mxu0 0.0
        %481 = vmatprep.subr.mxu0 0.0
        %482 = vmatpush1.msra.mxu0 0.0
        %483 = vmatprep.subr.mxu0 0.0
        %484 = vmatpush1.msra.mxu0 0.0
        %485 = vmatprep.subr.mxu0 0.0
        %486 = vmatpush1.msra.mxu0 0.0
        %487 = vmatprep.subr.mxu0 0.0
        %488 = vmatpush1.msra.mxu0 0.0
        %489 = vmatprep.subr.mxu0 0.0
        %490 = vmatpush1.msra.mxu0 0.0
        %491 = vmatprep.subr.mxu0 0.0
        %492 = vmatpush1.msra.mxu0 0.0
        %493 = vmatprep.subr.mxu0 0.0
        %494 = vmatpush1.msra.mxu0 0.0
        %495 = vmatprep.subr.mxu0 0.0
        %496 = vmatpush1.msra.mxu0 0.0
        %497 = vmatprep.subr.mxu0 0.0
        %498 = vmatpush1.msra.mxu0 0.0
        %499 = vmatprep.subr.mxu0 0.0
        %500 = vmatpush1.msra.mxu0 0.0
        %501 = vmatprep.subr.mxu0 0.0
        %502 = vmatpush1.msra.mxu0 0.0
        %503 = vmatprep.mubr.f32.mxu0 0.0
        %v504 = vand.u32 %v268, 4294901760
        %v505 = vsub.f32 %v268, %v504
        %506 = vmatmul.mubr.f32.gmra.mrb[0].mxu0 %v505
        %v507 = vpop.f32.mrb[0].mxu0
        %v508 = vadd.f32 %v431, %v507
        %v509 = vpop.f32.mrb[0].mxu0
        %v510 = vadd.f32 %v433, %v509
        %511 = vdwg.mxu0
        %v512 = vand.u32 %v273, 4294901760
        %513 = vmatprep.subr.mxu0 %v512
        %v514 = vand.u32 %v271, 4294901760
        %515 = vmatpush1.msra.mxu0 %v514
        %516 = vmatprep.subr.mxu0 0.0
        %517 = vmatpush1.msra.mxu0 0.0
        %518 = vmatprep.subr.mxu0 0.0
        %519 = vmatpush1.msra.mxu0 0.0
        %520 = vmatprep.subr.mxu0 0.0
        %521 = vmatpush1.msra.mxu0 0.0
        %522 = vmatprep.subr.mxu0 0.0
        %523 = vmatpush1.msra.mxu0 0.0
        %524 = vmatprep.subr.mxu0 0.0
        %525 = vmatpush1.msra.mxu0 0.0
        %526 = vmatprep.subr.mxu0 0.0
        %527 = vmatpush1.msra.mxu0 0.0
        %528 = vmatprep.subr.mxu0 0.0
        %529 = vmatpush1.msra.mxu0 0.0
        %530 = vmatprep.subr.mxu0 0.0
        %531 = vmatpush1.msra.mxu0 0.0
        %532 = vmatprep.subr.mxu0 0.0
        %533 = vmatpush1.msra.mxu0 0.0
        %534 = vmatprep.subr.mxu0 0.0
        %535 = vmatpush1.msra.mxu0 0.0
        %536 = vmatprep.subr.mxu0 0.0
        %537 = vmatpush1.msra.mxu0 0.0
        %538 = vmatprep.subr.mxu0 0.0
        %539 = vmatpush1.msra.mxu0 0.0
        %540 = vmatprep.subr.mxu0 0.0
        %541 = vmatpush1.msra.mxu0 0.0
        %542 = vmatprep.subr.mxu0 0.0
        %543 = vmatpush1.msra.mxu0 0.0
        %544 = vmatprep.subr.mxu0 0.0
        %545 = vmatpush1.msra.mxu0 0.0
        %546 = vmatprep.subr.mxu0 0.0
        %547 = vmatpush1.msra.mxu0 0.0
        %548 = vmatprep.subr.mxu0 0.0
        %549 = vmatpush1.msra.mxu0 0.0
        %550 = vmatprep.subr.mxu0 0.0
        %551 = vmatpush1.msra.mxu0 0.0
        %552 = vmatprep.subr.mxu0 0.0
        %553 = vmatpush1.msra.mxu0 0.0
        %554 = vmatprep.subr.mxu0 0.0
        %555 = vmatpush1.msra.mxu0 0.0
        %556 = vmatprep.subr.mxu0 0.0
        %557 = vmatpush1.msra.mxu0 0.0
        %558 = vmatprep.subr.mxu0 0.0
        %559 = vmatpush1.msra.mxu0 0.0
        %560 = vmatprep.subr.mxu0 0.0
        %561 = vmatpush1.msra.mxu0 0.0
        %562 = vmatprep.subr.mxu0 0.0
        %563 = vmatpush1.msra.mxu0 0.0
        %564 = vmatprep.subr.mxu0 0.0
        %565 = vmatpush1.msra.mxu0 0.0
        %566 = vmatprep.subr.mxu0 0.0
        %567 = vmatpush1.msra.mxu0 0.0
        %568 = vmatprep.subr.mxu0 0.0
        %569 = vmatpush1.msra.mxu0 0.0
        %570 = vmatprep.subr.mxu0 0.0
        %571 = vmatpush1.msra.mxu0 0.0
        %572 = vmatprep.subr.mxu0 0.0
        %573 = vmatpush1.msra.mxu0 0.0
        %574 = vmatprep.subr.mxu0 0.0
        %575 = vmatpush1.msra.mxu0 0.0
        %576 = vmatprep.subr.mxu0 0.0
        %577 = vmatpush1.msra.mxu0 0.0
        %578 = vmatprep.mubr.f32.mxu0 0.0
        %v579 = vand.u32 %v268, 4294901760
        %v580 = vsub.f32 %v268, %v579
        %v581 = vand.u32 %v580, 4294901760
        %582 = vmatmul.mubr.f32.gmra.mrb[0].mxu0 %v581
        %v583 = vpop.f32.mrb[0].mxu0
        %v584 = vadd.f32 %v508, %v583
        %v585 = vpop.f32.mrb[0].mxu0
        %v586 = vadd.f32 %v510, %v585
        %587 = vdwg.mxu0
        %v588 = vand.u32 %v273, 4294901760
        %v589 = vsub.f32 %v273, %v588
        %v590 = vand.u32 %v589, 4294901760
        %591 = vmatprep.subr.mxu0 %v590
        %v592 = vand.u32 %v271, 4294901760
        %v593 = vsub.f32 %v271, %v592
        %v594 = vand.u32 %v593, 4294901760
        %595 = vmatpush1.msra.mxu0 %v594
        %596 = vmatprep.subr.mxu0 0.0
        %597 = vmatpush1.msra.mxu0 0.0
        %598 = vmatprep.subr.mxu0 0.0
        %599 = vmatpush1.msra.mxu0 0.0
        %600 = vmatprep.subr.mxu0 0.0
        %601 = vmatpush1.msra.mxu0 0.0
        %602 = vmatprep.subr.mxu0 0.0
        %603 = vmatpush1.msra.mxu0 0.0
        %604 = vmatprep.subr.mxu0 0.0
        %605 = vmatpush1.msra.mxu0 0.0
        %606 = vmatprep.subr.mxu0 0.0
        %607 = vmatpush1.msra.mxu0 0.0
        %608 = vmatprep.subr.mxu0 0.0
        %609 = vmatpush1.msra.mxu0 0.0
        %610 = vmatprep.subr.mxu0 0.0
        %611 = vmatpush1.msra.mxu0 0.0
        %612 = vmatprep.subr.mxu0 0.0
        %613 = vmatpush1.msra.mxu0 0.0
        %614 = vmatprep.subr.mxu0 0.0
        %615 = vmatpush1.msra.mxu0 0.0
        %616 = vmatprep.subr.mxu0 0.0
        %617 = vmatpush1.msra.mxu0 0.0
        %618 = vmatprep.subr.mxu0 0.0
        %619 = vmatpush1.msra.mxu0 0.0
        %620 = vmatprep.subr.mxu0 0.0
        %621 = vmatpush1.msra.mxu0 0.0
        %622 = vmatprep.subr.mxu0 0.0
        %623 = vmatpush1.msra.mxu0 0.0
        %624 = vmatprep.subr.mxu0 0.0
        %625 = vmatpush1.msra.mxu0 0.0
        %626 = vmatprep.subr.mxu0 0.0
        %627 = vmatpush1.msra.mxu0 0.0
        %628 = vmatprep.subr.mxu0 0.0
        %629 = vmatpush1.msra.mxu0 0.0
        %630 = vmatprep.subr.mxu0 0.0
        %631 = vmatpush1.msra.mxu0 0.0
        %632 = vmatprep.subr.mxu0 0.0
        %633 = vmatpush1.msra.mxu0 0.0
        %634 = vmatprep.subr.mxu0 0.0
        %635 = vmatpush1.msra.mxu0 0.0
        %636 = vmatprep.subr.mxu0 0.0
        %637 = vmatpush1.msra.mxu0 0.0
        %638 = vmatprep.subr.mxu0 0.0
        %639 = vmatpush1.msra.mxu0 0.0
        %640 = vmatprep.subr.mxu0 0.0
        %641 = vmatpush1.msra.mxu0 0.0
        %642 = vmatprep.subr.mxu0 0.0
        %643 = vmatpush1.msra.mxu0 0.0
        %644 = vmatprep.subr.mxu0 0.0
        %645 = vmatpush1.msra.mxu0 0.0
        %646 = vmatprep.subr.mxu0 0.0
        %647 = vmatpush1.msra.mxu0 0.0
        %648 = vmatprep.subr.mxu0 0.0
        %649 = vmatpush1.msra.mxu0 0.0
        %650 = vmatprep.subr.mxu0 0.0
        %651 = vmatpush1.msra.mxu0 0.0
        %652 = vmatprep.subr.mxu0 0.0
        %653 = vmatpush1.msra.mxu0 0.0
        %654 = vmatprep.subr.mxu0 0.0
        %655 = vmatpush1.msra.mxu0 0.0
        %656 = vmatprep.subr.mxu0 0.0
        %657 = vmatpush1.msra.mxu0 0.0
        %658 = vmatprep.mubr.f32.mxu0 0.0
        %v659 = vand.u32 %v268, 4294901760
        %660 = vmatmul.mubr.f32.gmra.mrb[0].mxu0 %v659
        %v661 = vpop.f32.mrb[0].mxu0
        %v662 = vadd.f32 %v584, %v661
        %v663 = vpop.f32.mrb[0].mxu0
        %v664 = vadd.f32 %v586, %v663
        %665 = vdwg.mxu0
        %v666 = vand.u32 %v273, 4294901760
        %667 = vmatprep.subr.mxu0 %v666
        %v668 = vand.u32 %v271, 4294901760
        %669 = vmatpush1.msra.mxu0 %v668
        %670 = vmatprep.subr.mxu0 0.0
        %671 = vmatpush1.msra.mxu0 0.0
        %672 = vmatprep.subr.mxu0 0.0
        %673 = vmatpush1.msra.mxu0 0.0
        %674 = vmatprep.subr.mxu0 0.0
        %675 = vmatpush1.msra.mxu0 0.0
        %676 = vmatprep.subr.mxu0 0.0
        %677 = vmatpush1.msra.mxu0 0.0
        %678 = vmatprep.subr.mxu0 0.0
        %679 = vmatpush1.msra.mxu0 0.0
        %680 = vmatprep.subr.mxu0 0.0
        %681 = vmatpush1.msra.mxu0 0.0
        %682 = vmatprep.subr.mxu0 0.0
        %683 = vmatpush1.msra.mxu0 0.0
        %684 = vmatprep.subr.mxu0 0.0
        %685 = vmatpush1.msra.mxu0 0.0
        %686 = vmatprep.subr.mxu0 0.0
        %687 = vmatpush1.msra.mxu0 0.0
        %688 = vmatprep.subr.mxu0 0.0
        %689 = vmatpush1.msra.mxu0 0.0
        %690 = vmatprep.subr.mxu0 0.0
        %691 = vmatpush1.msra.mxu0 0.0
        %692 = vmatprep.subr.mxu0 0.0
        %693 = vmatpush1.msra.mxu0 0.0
        %694 = vmatprep.subr.mxu0 0.0
        %695 = vmatpush1.msra.mxu0 0.0
        %696 = vmatprep.subr.mxu0 0.0
        %697 = vmatpush1.msra.mxu0 0.0
        %698 = vmatprep.subr.mxu0 0.0
        %699 = vmatpush1.msra.mxu0 0.0
        %700 = vmatprep.subr.mxu0 0.0
        %701 = vmatpush1.msra.mxu0 0.0
        %702 = vmatprep.subr.mxu0 0.0
        %703 = vmatpush1.msra.mxu0 0.0
        %704 = vmatprep.subr.mxu0 0.0
        %705 = vmatpush1.msra.mxu0 0.0
        %706 = vmatprep.subr.mxu0 0.0
        %707 = vmatpush1.msra.mxu0 0.0
        %708 = vmatprep.subr.mxu0 0.0
        %709 = vmatpush1.msra.mxu0 0.0
        %710 = vmatprep.subr.mxu0 0.0
        %711 = vmatpush1.msra.mxu0 0.0
        %712 = vmatprep.subr.mxu0 0.0
        %713 = vmatpush1.msra.mxu0 0.0
        %714 = vmatprep.subr.mxu0 0.0
        %715 = vmatpush1.msra.mxu0 0.0
        %716 = vmatprep.subr.mxu0 0.0
        %717 = vmatpush1.msra.mxu0 0.0
        %718 = vmatprep.subr.mxu0 0.0
        %719 = vmatpush1.msra.mxu0 0.0
        %720 = vmatprep.subr.mxu0 0.0
        %721 = vmatpush1.msra.mxu0 0.0
        %722 = vmatprep.subr.mxu0 0.0
        %723 = vmatpush1.msra.mxu0 0.0
        %724 = vmatprep.subr.mxu0 0.0
        %725 = vmatpush1.msra.mxu0 0.0
        %726 = vmatprep.subr.mxu0 0.0
        %727 = vmatpush1.msra.mxu0 0.0
        %728 = vmatprep.subr.mxu0 0.0
        %729 = vmatpush1.msra.mxu0 0.0
        %730 = vmatprep.subr.mxu0 0.0
        %731 = vmatpush1.msra.mxu0 0.0
        %732 = vmatprep.mubr.f32.mxu0 0.0
        %v733 = vand.u32 %v268, 4294901760
        %734 = vmatmul.mubr.f32.gmra.mrb[0].mxu0 %v733
        %v735 = vpop.f32.mrb[0].mxu0
        %v736 = vadd.f32 %v662, %v735
        %v737 = vpop.f32.mrb[0].mxu0
        %v738 = vadd.f32 %v664, %v737
        %739 = vdwg.mxu0
        %v740 = vmax.f32 %v736, 0.0
        %v741 = vmax.f32 %v738, 0.0
        %743 = vset.pattern.permute.xlu0 0
        %744 = vperm.xlu0 %743, %v257
        %v745 = vpop.permute.xlu0 %744
        %vm747 = vcmask 64512
        %v749 = vsel %vm747, %v256, 0
        %v751 = vand.u32 %v741, 4294901760
        %752 = vmatprep.subr.mxu0 %v751
        %v753 = vand.u32 %v740, 4294901760
        %754 = vmatpush1.msra.mxu0 %v753
        %755 = vmatprep.subr.mxu0 0.0
        %756 = vmatpush1.msra.mxu0 0.0
        %757 = vmatprep.subr.mxu0 0.0
        %758 = vmatpush1.msra.mxu0 0.0
        %759 = vmatprep.subr.mxu0 0.0
        %760 = vmatpush1.msra.mxu0 0.0
        %761 = vmatprep.subr.mxu0 0.0
        %762 = vmatpush1.msra.mxu0 0.0
        %763 = vmatprep.subr.mxu0 0.0
        %764 = vmatpush1.msra.mxu0 0.0
        %765 = vmatprep.subr.mxu0 0.0
        %766 = vmatpush1.msra.mxu0 0.0
        %767 = vmatprep.subr.mxu0 0.0
        %768 = vmatpush1.msra.mxu0 0.0
        %769 = vmatprep.subr.mxu0 0.0
        %770 = vmatpush1.msra.mxu0 0.0
        %771 = vmatprep.subr.mxu0 0.0
        %772 = vmatpush1.msra.mxu0 0.0
        %773 = vmatprep.subr.mxu0 0.0
        %774 = vmatpush1.msra.mxu0 0.0
        %775 = vmatprep.subr.mxu0 0.0
        %776 = vmatpush1.msra.mxu0 0.0
        %777 = vmatprep.subr.mxu0 0.0
        %778 = vmatpush1.msra.mxu0 0.0
        %779 = vmatprep.subr.mxu0 0.0
        %780 = vmatpush1.msra.mxu0 0.0
        %781 = vmatprep.subr.mxu0 0.0
        %782 = vmatpush1.msra.mxu0 0.0
        %783 = vmatprep.subr.mxu0 0.0
        %784 = vmatpush1.msra.mxu0 0.0
        %785 = vmatprep.subr.mxu0 0.0
        %786 = vmatpush1.msra.mxu0 0.0
        %787 = vmatprep.subr.mxu0 0.0
        %788 = vmatpush1.msra.mxu0 0.0
        %789 = vmatprep.subr.mxu0 0.0
        %790 = vmatpush1.msra.mxu0 0.0
        %791 = vmatprep.subr.mxu0 0.0
        %792 = vmatpush1.msra.mxu0 0.0
        %793 = vmatprep.subr.mxu0 0.0
        %794 = vmatpush1.msra.mxu0 0.0
        %795 = vmatprep.subr.mxu0 0.0
        %796 = vmatpush1.msra.mxu0 0.0
        %797 = vmatprep.subr.mxu0 0.0
        %798 = vmatpush1.msra.mxu0 0.0
        %799 = vmatprep.subr.mxu0 0.0
        %800 = vmatpush1.msra.mxu0 0.0
        %801 = vmatprep.subr.mxu0 0.0
        %802 = vmatpush1.msra.mxu0 0.0
        %803 = vmatprep.subr.mxu0 0.0
        %804 = vmatpush1.msra.mxu0 0.0
        %805 = vmatprep.subr.mxu0 0.0
        %806 = vmatpush1.msra.mxu0 0.0
        %807 = vmatprep.subr.mxu0 0.0
        %808 = vmatpush1.msra.mxu0 0.0
        %809 = vmatprep.subr.mxu0 0.0
        %810 = vmatpush1.msra.mxu0 0.0
        %811 = vmatprep.subr.mxu0 0.0
        %812 = vmatpush1.msra.mxu0 0.0
        %813 = vmatprep.subr.mxu0 0.0
        %814 = vmatpush1.msra.mxu0 0.0
        %815 = vmatprep.subr.mxu0 0.0
        %816 = vmatpush1.msra.mxu0 0.0
        %817 = vmatprep.mubr.f32.mxu0 0.0
        %v818 = vand.u32 %v749, 4294901760
        %v819 = vsub.f32 %v749, %v818
        %v820 = vand.u32 %v819, 4294901760
        %v821 = vsub.f32 %v819, %v820
        %v822 = vand.u32 %v821, 4294901760
        %823 = vmatmul.mubr.f32.gmra.mrb[0].mxu0 %v822
        %v824 = vpop.f32.mrb[0].mxu0
        %v825 = vadd.f32 %v745, %v824
        %v826 = vpop.f32.mrb[0].mxu0
        %v827 = vadd.f32 %v745, %v826
        %828 = vdwg.mxu0
        %v829 = vand.u32 %v741, 4294901760
        %v830 = vsub.f32 %v741, %v829
        %v831 = vand.u32 %v830, 4294901760
        %v832 = vsub.f32 %v830, %v831
        %v833 = vand.u32 %v832, 4294901760
        %834 = vmatprep.subr.mxu0 %v833
        %v835 = vand.u32 %v740, 4294901760
        %v836 = vsub.f32 %v740, %v835
        %v837 = vand.u32 %v836, 4294901760
        %v838 = vsub.f32 %v836, %v837
        %v839 = vand.u32 %v838, 4294901760
        %840 = vmatpush1.msra.mxu0 %v839
        %841 = vmatprep.subr.mxu0 0.0
        %842 = vmatpush1.msra.mxu0 0.0
        %843 = vmatprep.subr.mxu0 0.0
        %844 = vmatpush1.msra.mxu0 0.0
        %845 = vmatprep.subr.mxu0 0.0
        %846 = vmatpush1.msra.mxu0 0.0
        %847 = vmatprep.subr.mxu0 0.0
        %848 = vmatpush1.msra.mxu0 0.0
        %849 = vmatprep.subr.mxu0 0.0
        %850 = vmatpush1.msra.mxu0 0.0
        %851 = vmatprep.subr.mxu0 0.0
        %852 = vmatpush1.msra.mxu0 0.0
        %853 = vmatprep.subr.mxu0 0.0
        %854 = vmatpush1.msra.mxu0 0.0
        %855 = vmatprep.subr.mxu0 0.0
        %856 = vmatpush1.msra.mxu0 0.0
        %857 = vmatprep.subr.mxu0 0.0
        %858 = vmatpush1.msra.mxu0 0.0
        %859 = vmatprep.subr.mxu0 0.0
        %860 = vmatpush1.msra.mxu0 0.0
        %861 = vmatprep.subr.mxu0 0.0
        %862 = vmatpush1.msra.mxu0 0.0
        %863 = vmatprep.subr.mxu0 0.0
        %864 = vmatpush1.msra.mxu0 0.0
        %865 = vmatprep.subr.mxu0 0.0
        %866 = vmatpush1.msra.mxu0 0.0
        %867 = vmatprep.subr.mxu0 0.0
        %868 = vmatpush1.msra.mxu0 0.0
        %869 = vmatprep.subr.mxu0 0.0
        %870 = vmatpush1.msra.mxu0 0.0
        %871 = vmatprep.subr.mxu0 0.0
        %872 = vmatpush1.msra.mxu0 0.0
        %873 = vmatprep.subr.mxu0 0.0
        %874 = vmatpush1.msra.mxu0 0.0
        %875 = vmatprep.subr.mxu0 0.0
        %876 = vmatpush1.msra.mxu0 0.0
        %877 = vmatprep.subr.mxu0 0.0
        %878 = vmatpush1.msra.mxu0 0.0
        %879 = vmatprep.subr.mxu0 0.0
        %880 = vmatpush1.msra.mxu0 0.0
        %881 = vmatprep.subr.mxu0 0.0
        %882 = vmatpush1.msra.mxu0 0.0
        %883 = vmatprep.subr.mxu0 0.0
        %884 = vmatpush1.msra.mxu0 0.0
        %885 = vmatprep.subr.mxu0 0.0
        %886 = vmatpush1.msra.mxu0 0.0
        %887 = vmatprep.subr.mxu0 0.0
        %888 = vmatpush1.msra.mxu0 0.0
        %889 = vmatprep.subr.mxu0 0.0
        %890 = vmatpush1.msra.mxu0 0.0
        %891 = vmatprep.subr.mxu0 0.0
        %892 = vmatpush1.msra.mxu0 0.0
        %893 = vmatprep.subr.mxu0 0.0
        %894 = vmatpush1.msra.mxu0 0.0
        %895 = vmatprep.subr.mxu0 0.0
        %896 = vmatpush1.msra.mxu0 0.0
        %897 = vmatprep.subr.mxu0 0.0
        %898 = vmatpush1.msra.mxu0 0.0
        %899 = vmatprep.subr.mxu0 0.0
        %900 = vmatpush1.msra.mxu0 0.0
        %901 = vmatprep.subr.mxu0 0.0
        %902 = vmatpush1.msra.mxu0 0.0
        %903 = vmatprep.mubr.f32.mxu0 0.0
        %v904 = vand.u32 %v749, 4294901760
        %905 = vmatmul.mubr.f32.gmra.mrb[0].mxu0 %v904
        %v906 = vpop.f32.mrb[0].mxu0
        %v907 = vadd.f32 %v825, %v906
        %v908 = vpop.f32.mrb[0].mxu0
        %v909 = vadd.f32 %v827, %v908
        %910 = vdwg.mxu0
        %v911 = vand.u32 %v741, 4294901760
        %v912 = vsub.f32 %v741, %v911
        %913 = vmatprep.subr.mxu0 %v912
        %v914 = vand.u32 %v740, 4294901760
        %v915 = vsub.f32 %v740, %v914
        %916 = vmatpush1.msra.mxu0 %v915
        %917 = vmatprep.subr.mxu0 0.0
        %918 = vmatpush1.msra.mxu0 0.0
        %919 = vmatprep.subr.mxu0 0.0
        %920 = vmatpush1.msra.mxu0 0.0
        %921 = vmatprep.subr.mxu0 0.0
        %922 = vmatpush1.msra.mxu0 0.0
        %923 = vmatprep.subr.mxu0 0.0
        %924 = vmatpush1.msra.mxu0 0.0
        %925 = vmatprep.subr.mxu0 0.0
        %926 = vmatpush1.msra.mxu0 0.0
        %927 = vmatprep.subr.mxu0 0.0
        %928 = vmatpush1.msra.mxu0 0.0
        %929 = vmatprep.subr.mxu0 0.0
        %930 = vmatpush1.msra.mxu0 0.0
        %931 = vmatprep.subr.mxu0 0.0
        %932 = vmatpush1.msra.mxu0 0.0
        %933 = vmatprep.subr.mxu0 0.0
        %934 = vmatpush1.msra.mxu0 0.0
        %935 = vmatprep.subr.mxu0 0.0
        %936 = vmatpush1.msra.mxu0 0.0
        %937 = vmatprep.subr.mxu0 0.0
        %938 = vmatpush1.msra.mxu0 0.0
        %939 = vmatprep.subr.mxu0 0.0
        %940 = vmatpush1.msra.mxu0 0.0
        %941 = vmatprep.subr.mxu0 0.0
        %942 = vmatpush1.msra.mxu0 0.0
        %943 = vmatprep.subr.mxu0 0.0
        %944 = vmatpush1.msra.mxu0 0.0
        %945 = vmatprep.subr.mxu0 0.0
        %946 = vmatpush1.msra.mxu0 0.0
        %947 = vmatprep.subr.mxu0 0.0
        %948 = vmatpush1.msra.mxu0 0.0
        %949 = vmatprep.subr.mxu0 0.0
        %950 = vmatpush1.msra.mxu0 0.0
        %951 = vmatprep.subr.mxu0 0.0
        %952 = vmatpush1.msra.mxu0 0.0
        %953 = vmatprep.subr.mxu0 0.0
        %954 = vmatpush1.msra.mxu0 0.0
        %955 = vmatprep.subr.mxu0 0.0
        %956 = vmatpush1.msra.mxu0 0.0
        %957 = vmatprep.subr.mxu0 0.0
        %958 = vmatpush1.msra.mxu0 0.0
        %959 = vmatprep.subr.mxu0 0.0
        %960 = vmatpush1.msra.mxu0 0.0
        %961 = vmatprep.subr.mxu0 0.0
        %962 = vmatpush1.msra.mxu0 0.0
        %963 = vmatprep.subr.mxu0 0.0
        %964 = vmatpush1.msra.mxu0 0.0
        %965 = vmatprep.subr.mxu0 0.0
        %966 = vmatpush1.msra.mxu0 0.0
        %967 = vmatprep.subr.mxu0 0.0
        %968 = vmatpush1.msra.mxu0 0.0
        %969 = vmatprep.subr.mxu0 0.0
        %970 = vmatpush1.msra.mxu0 0.0
        %971 = vmatprep.subr.mxu0 0.0
        %972 = vmatpush1.msra.mxu0 0.0
        %973 = vmatprep.subr.mxu0 0.0
        %974 = vmatpush1.msra.mxu0 0.0
        %975 = vmatprep.subr.mxu0 0.0
        %976 = vmatpush1.msra.mxu0 0.0
        %977 = vmatprep.subr.mxu0 0.0
        %978 = vmatpush1.msra.mxu0 0.0
        %979 = vmatprep.mubr.f32.mxu0 0.0
        %v980 = vand.u32 %v749, 4294901760
        %v981 = vsub.f32 %v749, %v980
        %982 = vmatmul.mubr.f32.gmra.mrb[0].mxu0 %v981
        %v983 = vpop.f32.mrb[0].mxu0
        %v984 = vadd.f32 %v907, %v983
        %v985 = vpop.f32.mrb[0].mxu0
        %v986 = vadd.f32 %v909, %v985
        %987 = vdwg.mxu0
        %v988 = vand.u32 %v741, 4294901760
        %989 = vmatprep.subr.mxu0 %v988
        %v990 = vand.u32 %v740, 4294901760
        %991 = vmatpush1.msra.mxu0 %v990
        %992 = vmatprep.subr.mxu0 0.0
        %993 = vmatpush1.msra.mxu0 0.0
        %994 = vmatprep.subr.mxu0 0.0
        %995 = vmatpush1.msra.mxu0 0.0
        %996 = vmatprep.subr.mxu0 0.0
        %997 = vmatpush1.msra.mxu0 0.0
        %998 = vmatprep.subr.mxu0 0.0
        %999 = vmatpush1.msra.mxu0 0.0
        %1000 = vmatprep.subr.mxu0 0.0
        %1001 = vmatpush1.msra.mxu0 0.0
        %1002 = vmatprep.subr.mxu0 0.0
        %1003 = vmatpush1.msra.mxu0 0.0
        %1004 = vmatprep.subr.mxu0 0.0
        %1005 = vmatpush1.msra.mxu0 0.0
        %1006 = vmatprep.subr.mxu0 0.0
        %1007 = vmatpush1.msra.mxu0 0.0
        %1008 = vmatprep.subr.mxu0 0.0
        %1009 = vmatpush1.msra.mxu0 0.0
        %1010 = vmatprep.subr.mxu0 0.0
        %1011 = vmatpush1.msra.mxu0 0.0
        %1012 = vmatprep.subr.mxu0 0.0
        %1013 = vmatpush1.msra.mxu0 0.0
        %1014 = vmatprep.subr.mxu0 0.0
        %1015 = vmatpush1.msra.mxu0 0.0
        %1016 = vmatprep.subr.mxu0 0.0
        %1017 = vmatpush1.msra.mxu0 0.0
        %1018 = vmatprep.subr.mxu0 0.0
        %1019 = vmatpush1.msra.mxu0 0.0
        %1020 = vmatprep.subr.mxu0 0.0
        %1021 = vmatpush1.msra.mxu0 0.0
        %1022 = vmatprep.subr.mxu0 0.0
        %1023 = vmatpush1.msra.mxu0 0.0
        %1024 = vmatprep.subr.mxu0 0.0
        %1025 = vmatpush1.msra.mxu0 0.0
        %1026 = vmatprep.subr.mxu0 0.0
        %1027 = vmatpush1.msra.mxu0 0.0
        %1028 = vmatprep.subr.mxu0 0.0
        %1029 = vmatpush1.msra.mxu0 0.0
        %1030 = vmatprep.subr.mxu0 0.0
        %1031 = vmatpush1.msra.mxu0 0.0
        %1032 = vmatprep.subr.mxu0 0.0
        %1033 = vmatpush1.msra.mxu0 0.0
        %1034 = vmatprep.subr.mxu0 0.0
        %1035 = vmatpush1.msra.mxu0 0.0
        %1036 = vmatprep.subr.mxu0 0.0
        %1037 = vmatpush1.msra.mxu0 0.0
        %1038 = vmatprep.subr.mxu0 0.0
        %1039 = vmatpush1.msra.mxu0 0.0
        %1040 = vmatprep.subr.mxu0 0.0
        %1041 = vmatpush1.msra.mxu0 0.0
        %1042 = vmatprep.subr.mxu0 0.0
        %1043 = vmatpush1.msra.mxu0 0.0
        %1044 = vmatprep.subr.mxu0 0.0
        %1045 = vmatpush1.msra.mxu0 0.0
        %1046 = vmatprep.subr.mxu0 0.0
        %1047 = vmatpush1.msra.mxu0 0.0
        %1048 = vmatprep.subr.mxu0 0.0
        %1049 = vmatpush1.msra.mxu0 0.0
        %1050 = vmatprep.subr.mxu0 0.0
        %1051 = vmatpush1.msra.mxu0 0.0
        %1052 = vmatprep.subr.mxu0 0.0
        %1053 = vmatpush1.msra.mxu0 0.0
        %1054 = vmatprep.mubr.f32.mxu0 0.0
        %v1055 = vand.u32 %v749, 4294901760
        %v1056 = vsub.f32 %v749, %v1055
        %v1057 = vand.u32 %v1056, 4294901760
        %1058 = vmatmul.mubr.f32.gmra.mrb[0].mxu0 %v1057
        %v1059 = vpop.f32.mrb[0].mxu0
        %v1060 = vadd.f32 %v984, %v1059
        %v1061 = vpop.f32.mrb[0].mxu0
        %v1062 = vadd.f32 %v986, %v1061
        %1063 = vdwg.mxu0
        %v1064 = vand.u32 %v741, 4294901760
        %v1065 = vsub.f32 %v741, %v1064
        %v1066 = vand.u32 %v1065, 4294901760
        %1067 = vmatprep.subr.mxu0 %v1066
        %v1068 = vand.u32 %v740, 4294901760
        %v1069 = vsub.f32 %v740, %v1068
        %v1070 = vand.u32 %v1069, 4294901760
        %1071 = vmatpush1.msra.mxu0 %v1070
        %1072 = vmatprep.subr.mxu0 0.0
        %1073 = vmatpush1.msra.mxu0 0.0
        %1074 = vmatprep.subr.mxu0 0.0
        %1075 = vmatpush1.msra.mxu0 0.0
        %1076 = vmatprep.subr.mxu0 0.0
        %1077 = vmatpush1.msra.mxu0 0.0
        %1078 = vmatprep.subr.mxu0 0.0
        %1079 = vmatpush1.msra.mxu0 0.0
        %1080 = vmatprep.subr.mxu0 0.0
        %1081 = vmatpush1.msra.mxu0 0.0
        %1082 = vmatprep.subr.mxu0 0.0
        %1083 = vmatpush1.msra.mxu0 0.0
        %1084 = vmatprep.subr.mxu0 0.0
        %1085 = vmatpush1.msra.mxu0 0.0
        %1086 = vmatprep.subr.mxu0 0.0
        %1087 = vmatpush1.msra.mxu0 0.0
        %1088 = vmatprep.subr.mxu0 0.0
        %1089 = vmatpush1.msra.mxu0 0.0
        %1090 = vmatprep.subr.mxu0 0.0
        %1091 = vmatpush1.msra.mxu0 0.0
        %1092 = vmatprep.subr.mxu0 0.0
        %1093 = vmatpush1.msra.mxu0 0.0
        %1094 = vmatprep.subr.mxu0 0.0
        %1095 = vmatpush1.msra.mxu0 0.0
        %1096 = vmatprep.subr.mxu0 0.0
        %1097 = vmatpush1.msra.mxu0 0.0
        %1098 = vmatprep.subr.mxu0 0.0
        %1099 = vmatpush1.msra.mxu0 0.0
        %1100 = vmatprep.subr.mxu0 0.0
        %1101 = vmatpush1.msra.mxu0 0.0
        %1102 = vmatprep.subr.mxu0 0.0
        %1103 = vmatpush1.msra.mxu0 0.0
        %1104 = vmatprep.subr.mxu0 0.0
        %1105 = vmatpush1.msra.mxu0 0.0
        %1106 = vmatprep.subr.mxu0 0.0
        %1107 = vmatpush1.msra.mxu0 0.0
        %1108 = vmatprep.subr.mxu0 0.0
        %1109 = vmatpush1.msra.mxu0 0.0
        %1110 = vmatprep.subr.mxu0 0.0
        %1111 = vmatpush1.msra.mxu0 0.0
        %1112 = vmatprep.subr.mxu0 0.0
        %1113 = vmatpush1.msra.mxu0 0.0
        %1114 = vmatprep.subr.mxu0 0.0
        %1115 = vmatpush1.msra.mxu0 0.0
        %1116 = vmatprep.subr.mxu0 0.0
        %1117 = vmatpush1.msra.mxu0 0.0
        %1118 = vmatprep.subr.mxu0 0.0
        %1119 = vmatpush1.msra.mxu0 0.0
        %1120 = vmatprep.subr.mxu0 0.0
        %1121 = vmatpush1.msra.mxu0 0.0
        %1122 = vmatprep.subr.mxu0 0.0
        %1123 = vmatpush1.msra.mxu0 0.0
        %1124 = vmatprep.subr.mxu0 0.0
        %1125 = vmatpush1.msra.mxu0 0.0
        %1126 = vmatprep.subr.mxu0 0.0
        %1127 = vmatpush1.msra.mxu0 0.0
        %1128 = vmatprep.subr.mxu0 0.0
        %1129 = vmatpush1.msra.mxu0 0.0
        %1130 = vmatprep.subr.mxu0 0.0
        %1131 = vmatpush1.msra.mxu0 0.0
        %1132 = vmatprep.subr.mxu0 0.0
        %1133 = vmatpush1.msra.mxu0 0.0
        %1134 = vmatprep.mubr.f32.mxu0 0.0
        %v1135 = vand.u32 %v749, 4294901760
        %1136 = vmatmul.mubr.f32.gmra.mrb[0].mxu0 %v1135
        %v1137 = vpop.f32.mrb[0].mxu0
        %v1138 = vadd.f32 %v1060, %v1137
        %v1139 = vpop.f32.mrb[0].mxu0
        %v1140 = vadd.f32 %v1062, %v1139
        %1141 = vdwg.mxu0
        %v1142 = vand.u32 %v741, 4294901760
        %1143 = vmatprep.subr.mxu0 %v1142
        %v1144 = vand.u32 %v740, 4294901760
        %1145 = vmatpush1.msra.mxu0 %v1144
        %1146 = vmatprep.subr.mxu0 0.0
        %1147 = vmatpush1.msra.mxu0 0.0
        %1148 = vmatprep.subr.mxu0 0.0
        %1149 = vmatpush1.msra.mxu0 0.0
        %1150 = vmatprep.subr.mxu0 0.0
        %1151 = vmatpush1.msra.mxu0 0.0
        %1152 = vmatprep.subr.mxu0 0.0
        %1153 = vmatpush1.msra.mxu0 0.0
        %1154 = vmatprep.subr.mxu0 0.0
        %1155 = vmatpush1.msra.mxu0 0.0
        %1156 = vmatprep.subr.mxu0 0.0
        %1157 = vmatpush1.msra.mxu0 0.0
        %1158 = vmatprep.subr.mxu0 0.0
        %1159 = vmatpush1.msra.mxu0 0.0
        %1160 = vmatprep.subr.mxu0 0.0
        %1161 = vmatpush1.msra.mxu0 0.0
        %1162 = vmatprep.subr.mxu0 0.0
        %1163 = vmatpush1.msra.mxu0 0.0
        %1164 = vmatprep.subr.mxu0 0.0
        %1165 = vmatpush1.msra.mxu0 0.0
        %1166 = vmatprep.subr.mxu0 0.0
        %1167 = vmatpush1.msra.mxu0 0.0
        %1168 = vmatprep.subr.mxu0 0.0
        %1169 = vmatpush1.msra.mxu0 0.0
        %1170 = vmatprep.subr.mxu0 0.0
        %1171 = vmatpush1.msra.mxu0 0.0
        %1172 = vmatprep.subr.mxu0 0.0
        %1173 = vmatpush1.msra.mxu0 0.0
        %1174 = vmatprep.subr.mxu0 0.0
        %1175 = vmatpush1.msra.mxu0 0.0
        %1176 = vmatprep.subr.mxu0 0.0
        %1177 = vmatpush1.msra.mxu0 0.0
        %1178 = vmatprep.subr.mxu0 0.0
        %1179 = vmatpush1.msra.mxu0 0.0
        %1180 = vmatprep.subr.mxu0 0.0
        %1181 = vmatpush1.msra.mxu0 0.0
        %1182 = vmatprep.subr.mxu0 0.0
        %1183 = vmatpush1.msra.mxu0 0.0
        %1184 = vmatprep.subr.mxu0 0.0
        %1185 = vmatpush1.msra.mxu0 0.0
        %1186 = vmatprep.subr.mxu0 0.0
        %1187 = vmatpush1.msra.mxu0 0.0
        %1188 = vmatprep.subr.mxu0 0.0
        %1189 = vmatpush1.msra.mxu0 0.0
        %1190 = vmatprep.subr.mxu0 0.0
        %1191 = vmatpush1.msra.mxu0 0.0
        %1192 = vmatprep.subr.mxu0 0.0
        %1193 = vmatpush1.msra.mxu0 0.0
        %1194 = vmatprep.subr.mxu0 0.0
        %1195 = vmatpush1.msra.mxu0 0.0
        %1196 = vmatprep.subr.mxu0 0.0
        %1197 = vmatpush1.msra.mxu0 0.0
        %1198 = vmatprep.subr.mxu0 0.0
        %1199 = vmatpush1.msra.mxu0 0.0
        %1200 = vmatprep.subr.mxu0 0.0
        %1201 = vmatpush1.msra.mxu0 0.0
        %1202 = vmatprep.subr.mxu0 0.0
        %1203 = vmatpush1.msra.mxu0 0.0
        %1204 = vmatprep.subr.mxu0 0.0
        %1205 = vmatpush1.msra.mxu0 0.0
        %1206 = vmatprep.subr.mxu0 0.0
        %1207 = vmatpush1.msra.mxu0 0.0
        %1208 = vmatprep.mubr.f32.mxu0 0.0
        %v1209 = vand.u32 %v749, 4294901760
        %1210 = vmatmul.mubr.f32.gmra.mrb[0].mxu0 %v1209
        %v1211 = vpop.f32.mrb[0].mxu0
        %v1212 = vadd.f32 %v1138, %v1211
        %v1213 = vpop.f32.mrb[0].mxu0
        %v1214 = vadd.f32 %v1140, %v1213
        %1215 = vdwg.mxu0
        %v1216 = vmax.f32 %v1212, 0.0
        %v1217 = vmax.f32 %v1214, 0.0
        %1218 = vst [vmem:[%s242] sm:$0xff] %v1216
        %1219 = vst [vmem:[%s242 + $0x8] sm:$0xff] %v1217
        %s1220 = sand.u32 %s153, 1
        %s1221 = scalar_lea.sflag [#allocation3], %s1220
        %s1222 = sand.u32 %s153, 1
        %s1223 = smul.addr %s1222, 16
        %s1224 = scalar_lea.vmem [#allocation2], %s1223
        // Predicated region
        $region41: #{tpu_custom_call.1} parent=39 // pred_check
          %p1225 = pneg %p163
        $region42: #{tpu_custom_call.1} parent=39 // pred_check_branch
          %1227 = sbr.rel (%p1225) target = $region44
        $region43: #{tpu_custom_call.1} parent=39 // pred_region
          %s1228 = smul.u32 2, %s24
          %s1230 = ssub.s32 256, 256
          %1231 = vsyncadd %s1221, %s1230
          %s1232 = smul.addr %s23, 2
          %s1233 = sadd.s32 %s1228, %s1232
          %s1234 = smul.addr %s1233, 128
          %s1235 = scalar_lea.hbm %s5, %s1234
          %s1237 = sshll.u32 %s1224, 4
          %s1238 = int_to_ptr.vmem [resolvable:$true] %s1237
          %1240 = dma.vmem_to_hbm [thread:$0]  %s1238, 256, %s1235, %s1221
        $region44: #{tpu_custom_call.1} parent=39 // pred_fallthru
          _
      $region40: #{tpu_custom_call.1} parent=5 // pred_fallthru
        _
      %p1241 = scmp.le.s32.totalorder 2, %s14
      // Predicated region
      $region45: #{tpu_custom_call.1} parent=5 // pred_check
        %p1242 = pneg %p1241
      $region46: #{tpu_custom_call.1} parent=5 // pred_check_branch
        %1244 = sbr.rel (%p1242) target = $region48
      $region47: #{tpu_custom_call.1} parent=5 // pred_region
        %s1245 = ssub.s32 %s14, 2
        // Predicated region
        $region49: #{tpu_custom_call.1} parent=47 // pred_check
          %p1246 = pneg %p169
        $region50: #{tpu_custom_call.1} parent=47 // pred_check_branch
          %1248 = sbr.rel (%p1246) target = $region52
        $region51: #{tpu_custom_call.1} parent=47 // pred_region
          %s1249 = sand.u32 %s154, 1
          %s1250 = scalar_lea.sflag [#allocation3], %s1249
          %s1251 = sand.u32 %s154, 1
          %s1252 = smul.addr %s1251, 16
          %s1253 = scalar_lea.vmem [#allocation2], %s1252
          %1254 = dma.done %s1250, 256
        $region52: #{tpu_custom_call.1} parent=47 // pred_fallthru
          _
      $region48: #{tpu_custom_call.1} parent=5 // pred_fallthru
        _
    $region6: #{tpu_custom_call.1} parent=1 // loop_footer
      %s18 = sadd.s32 1, %s14
    $region7: #{tpu_custom_call.1} parent=1 // loop_footer_branch
      %13 = sbr.rel target = $region3
    $region8: #{tpu_custom_call.1} parent=1 // loop_exit
      _
    %1255 = vsyncpa [#allocation3], 1
    %s1256 = scalar_lea.sflag [#allocation3], 1
    %1257 = vsyncpa %s1256, 1

</llo_original>
